<compile_context>
chip_gen: v5e
topology: v5e:2x2
jax: 0.10.0
libtpu: 0.0.40
codegen_flags: <defaults>
</compile_context>

<pallas_src>
import jax
import jax.numpy as jnp
from jax.experimental import pallas as pl
from jax.experimental.pallas import tpu as pltpu

BATCH = 1
DIM = 2
TIME = 10


def node_rollout_kernel(dt_ref, w_ref, b_ref, z0_ref, traj_ref):
    # dt_ref   : SMEM (TIME-1,)          float32   -- dt[i-1] = t[i] - t[i-1]
    # w_ref    : SMEM (DIM*DIM,)         float32   -- [w00, w01, w10, w11]
    # b_ref    : SMEM (DIM,)             float32
    # z0_ref   : VMEM (BATCH, DIM)       float32
    # traj_ref : VMEM (BATCH, TIME, DIM) float32   (output)

    # Weights / bias as SMEM scalars (DIM == 2).
    w00 = w_ref[0]
    w01 = w_ref[1]
    w10 = w_ref[2]
    w11 = w_ref[3]
    b0 = b_ref[0]
    b1 = b_ref[1]

    # Carry the state as two (BATCH, 1) column vregs: no lane extraction and
    # no MXU inside the serial dependence chain.
    z_a = z0_ref[:, 0:1]
    z_b = z0_ref[:, 1:2]

    cols_a = [z_a]
    cols_b = [z_b]
    for i in range(1, TIME):                 # static trip count, fully unrolled
        dt = dt_ref[i - 1]                   # scalar from SMEM
        # f(z) = tanh(z @ W + b), decomposed into scalar-broadcast FMAs (VPU/EUP)
        f_a = jnp.tanh(w00 * z_a + w10 * z_b + b0)
        f_b = jnp.tanh(w01 * z_a + w11 * z_b + b1)
        z_a = z_a + dt * f_a                 # explicit Euler step
        z_b = z_b + dt * f_b
        cols_a.append(z_a)
        cols_b.append(z_b)

    # Coalesce the whole trajectory into one (TIME, DIM) slab; single store.
    col_a = jnp.concatenate(cols_a, axis=0)              # (TIME, 1)
    col_b = jnp.concatenate(cols_b, axis=0)              # (TIME, 1)
    traj_ref[0] = jnp.concatenate([col_a, col_b], axis=1)  # (TIME, DIM)


@jax.jit
def node_forward(z0, t, W, b):
    """NODE.forward: returns traj of shape (BATCH, TIME, DIM), float32."""
    dt = t[1:] - t[:-1]                      # (TIME-1,), folded into the jit
    w_flat = W.reshape(-1)                   # (DIM*DIM,) row-major
    b_flat = b.reshape(-1)                   # (DIM,)
    return pl.pallas_call(
        node_rollout_kernel,
        out_shape=jax.ShapeDtypeStruct((BATCH, TIME, DIM), jnp.float32),
        in_specs=[
            pl.BlockSpec(memory_space=pltpu.MemorySpace.SMEM),  # dt
            pl.BlockSpec(memory_space=pltpu.MemorySpace.SMEM),  # W (flat)
            pl.BlockSpec(memory_space=pltpu.MemorySpace.SMEM),  # b (flat)
            pl.BlockSpec(memory_space=pltpu.MemorySpace.VMEM),  # z0
        ],
        out_specs=pl.BlockSpec(memory_space=pltpu.MemorySpace.VMEM),
    )(dt, w_flat, b_flat, z0)


def node_forward_ref(z0, t, W, b):
    """Pure-JAX reference with identical semantics."""
    traj = [z0]
    z = z0
    for i in range(1, TIME):
        dt = t[i] - t[i - 1]
        z = z + dt * jnp.tanh(z @ W + b)
        traj.append(z)
    return jnp.stack(traj, axis=1)  # (BATCH, TIME, DIM)


if __name__ == "__main__":
    key = jax.random.PRNGKey(0)
    k_z0, k_w, k_b = jax.random.split(key, 3)

    z0 = jax.random.normal(k_z0, (BATCH, DIM), dtype=jnp.float32)
    t = jnp.linspace(0.0, 1.0, TIME, dtype=jnp.float32)
    # theta = self.module.parameters  (deterministic synthetic init)
    W = jax.random.normal(k_w, (DIM, DIM), dtype=jnp.float32) * 0.5
    b = jax.random.normal(k_b, (1, DIM), dtype=jnp.float32) * 0.1

    traj = jax.block_until_ready(node_forward(z0, t, W, b))

    ref = node_forward_ref(z0, t, W, b)
    assert traj.shape == (BATCH, TIME, DIM)
    assert jnp.allclose(traj, ref, atol=1e-5, rtol=1e-5)

    # TODO(synk): Adjoint_ODE.backward (custom adjoint pass) is training-only
    # and references undefined attrs (ctx.module, odeint.ODESolve); forward only.
    print("KERNEL_OK")
</pallas_src>

<mosaic_0001>
module attributes {stable_mosaic.version = 11 : i64} {
  func.func @node_rollout_kernel(%arg0: memref<9xf32, #tpu.memory_space<smem>>, %arg1: memref<4xf32, #tpu.memory_space<smem>>, %arg2: memref<2xf32, #tpu.memory_space<smem>>, %arg3: memref<1x2xf32, #tpu.memory_space<vmem>>, %arg4: memref<1x10x2xf32, #tpu.memory_space<vmem>>) attributes {dimension_semantics = [], scalar_prefetch = 0 : i64, scratch_operands = 0 : i64, tpu.core_type = #tpu.core_type<tc>} {
    %c0 = arith.constant 0 : index
    %0 = memref.load %arg1[%c0] : memref<4xf32, #tpu.memory_space<smem>>
    %c1 = arith.constant 1 : index
    %1 = memref.load %arg1[%c1] : memref<4xf32, #tpu.memory_space<smem>>
    %c2 = arith.constant 2 : index
    %2 = memref.load %arg1[%c2] : memref<4xf32, #tpu.memory_space<smem>>
    %c3 = arith.constant 3 : index
    %3 = memref.load %arg1[%c3] : memref<4xf32, #tpu.memory_space<smem>>
    %c0_0 = arith.constant 0 : index
    %4 = memref.load %arg2[%c0_0] : memref<2xf32, #tpu.memory_space<smem>>
    %c1_1 = arith.constant 1 : index
    %5 = memref.load %arg2[%c1_1] : memref<2xf32, #tpu.memory_space<smem>>
    %c0_2 = arith.constant 0 : index
    %c0_3 = arith.constant 0 : index
    %6 = vector.load %arg3[%c0_2, %c0_3] : memref<1x2xf32, #tpu.memory_space<vmem>>, vector<1x1xf32>
    %c0_4 = arith.constant 0 : index
    %c1_5 = arith.constant 1 : index
    %7 = vector.load %arg3[%c0_4, %c1_5] : memref<1x2xf32, #tpu.memory_space<vmem>>, vector<1x1xf32>
    %c0_6 = arith.constant 0 : index
    %8 = memref.load %arg0[%c0_6] : memref<9xf32, #tpu.memory_space<smem>>
    %9 = vector.broadcast %0 : f32 to vector<1x1xf32>
    %10 = arith.mulf %9, %6 : vector<1x1xf32>
    %11 = vector.broadcast %2 : f32 to vector<1x1xf32>
    %12 = arith.mulf %11, %7 : vector<1x1xf32>
    %13 = arith.addf %10, %12 : vector<1x1xf32>
    %14 = vector.broadcast %4 : f32 to vector<1x1xf32>
    %15 = arith.addf %13, %14 : vector<1x1xf32>
    %16 = math.tanh %15 : vector<1x1xf32>
    %17 = vector.broadcast %1 : f32 to vector<1x1xf32>
    %18 = arith.mulf %17, %6 : vector<1x1xf32>
    %19 = vector.broadcast %3 : f32 to vector<1x1xf32>
    %20 = arith.mulf %19, %7 : vector<1x1xf32>
    %21 = arith.addf %18, %20 : vector<1x1xf32>
    %22 = vector.broadcast %5 : f32 to vector<1x1xf32>
    %23 = arith.addf %21, %22 : vector<1x1xf32>
    %24 = math.tanh %23 : vector<1x1xf32>
    %25 = vector.broadcast %8 : f32 to vector<1x1xf32>
    %26 = arith.mulf %25, %16 : vector<1x1xf32>
    %27 = arith.addf %6, %26 : vector<1x1xf32>
    %28 = vector.broadcast %8 : f32 to vector<1x1xf32>
    %29 = arith.mulf %28, %24 : vector<1x1xf32>
    %30 = arith.addf %7, %29 : vector<1x1xf32>
    %c1_7 = arith.constant 1 : index
    %31 = memref.load %arg0[%c1_7] : memref<9xf32, #tpu.memory_space<smem>>
    %32 = vector.broadcast %0 : f32 to vector<1x1xf32>
    %33 = arith.mulf %32, %27 : vector<1x1xf32>
    %34 = vector.broadcast %2 : f32 to vector<1x1xf32>
    %35 = arith.mulf %34, %30 : vector<1x1xf32>
    %36 = arith.addf %33, %35 : vector<1x1xf32>
    %37 = vector.broadcast %4 : f32 to vector<1x1xf32>
    %38 = arith.addf %36, %37 : vector<1x1xf32>
    %39 = math.tanh %38 : vector<1x1xf32>
    %40 = vector.broadcast %1 : f32 to vector<1x1xf32>
    %41 = arith.mulf %40, %27 : vector<1x1xf32>
    %42 = vector.broadcast %3 : f32 to vector<1x1xf32>
    %43 = arith.mulf %42, %30 : vector<1x1xf32>
    %44 = arith.addf %41, %43 : vector<1x1xf32>
    %45 = vector.broadcast %5 : f32 to vector<1x1xf32>
    %46 = arith.addf %44, %45 : vector<1x1xf32>
    %47 = math.tanh %46 : vector<1x1xf32>
    %48 = vector.broadcast %31 : f32 to vector<1x1xf32>
    %49 = arith.mulf %48, %39 : vector<1x1xf32>
    %50 = arith.addf %27, %49 : vector<1x1xf32>
    %51 = vector.broadcast %31 : f32 to vector<1x1xf32>
    %52 = arith.mulf %51, %47 : vector<1x1xf32>
    %53 = arith.addf %30, %52 : vector<1x1xf32>
    %c2_8 = arith.constant 2 : index
    %54 = memref.load %arg0[%c2_8] : memref<9xf32, #tpu.memory_space<smem>>
    %55 = vector.broadcast %0 : f32 to vector<1x1xf32>
    %56 = arith.mulf %55, %50 : vector<1x1xf32>
    %57 = vector.broadcast %2 : f32 to vector<1x1xf32>
    %58 = arith.mulf %57, %53 : vector<1x1xf32>
    %59 = arith.addf %56, %58 : vector<1x1xf32>
    %60 = vector.broadcast %4 : f32 to vector<1x1xf32>
    %61 = arith.addf %59, %60 : vector<1x1xf32>
    %62 = math.tanh %61 : vector<1x1xf32>
    %63 = vector.broadcast %1 : f32 to vector<1x1xf32>
    %64 = arith.mulf %63, %50 : vector<1x1xf32>
    %65 = vector.broadcast %3 : f32 to vector<1x1xf32>
    %66 = arith.mulf %65, %53 : vector<1x1xf32>
    %67 = arith.addf %64, %66 : vector<1x1xf32>
    %68 = vector.broadcast %5 : f32 to vector<1x1xf32>
    %69 = arith.addf %67, %68 : vector<1x1xf32>
    %70 = math.tanh %69 : vector<1x1xf32>
    %71 = vector.broadcast %54 : f32 to vector<1x1xf32>
    %72 = arith.mulf %71, %62 : vector<1x1xf32>
    %73 = arith.addf %50, %72 : vector<1x1xf32>
    %74 = vector.broadcast %54 : f32 to vector<1x1xf32>
    %75 = arith.mulf %74, %70 : vector<1x1xf32>
    %76 = arith.addf %53, %75 : vector<1x1xf32>
    %c3_9 = arith.constant 3 : index
    %77 = memref.load %arg0[%c3_9] : memref<9xf32, #tpu.memory_space<smem>>
    %78 = vector.broadcast %0 : f32 to vector<1x1xf32>
    %79 = arith.mulf %78, %73 : vector<1x1xf32>
    %80 = vector.broadcast %2 : f32 to vector<1x1xf32>
    %81 = arith.mulf %80, %76 : vector<1x1xf32>
    %82 = arith.addf %79, %81 : vector<1x1xf32>
    %83 = vector.broadcast %4 : f32 to vector<1x1xf32>
    %84 = arith.addf %82, %83 : vector<1x1xf32>
    %85 = math.tanh %84 : vector<1x1xf32>
    %86 = vector.broadcast %1 : f32 to vector<1x1xf32>
    %87 = arith.mulf %86, %73 : vector<1x1xf32>
    %88 = vector.broadcast %3 : f32 to vector<1x1xf32>
    %89 = arith.mulf %88, %76 : vector<1x1xf32>
    %90 = arith.addf %87, %89 : vector<1x1xf32>
    %91 = vector.broadcast %5 : f32 to vector<1x1xf32>
    %92 = arith.addf %90, %91 : vector<1x1xf32>
    %93 = math.tanh %92 : vector<1x1xf32>
    %94 = vector.broadcast %77 : f32 to vector<1x1xf32>
    %95 = arith.mulf %94, %85 : vector<1x1xf32>
    %96 = arith.addf %73, %95 : vector<1x1xf32>
    %97 = vector.broadcast %77 : f32 to vector<1x1xf32>
    %98 = arith.mulf %97, %93 : vector<1x1xf32>
    %99 = arith.addf %76, %98 : vector<1x1xf32>
    %c4 = arith.constant 4 : index
    %100 = memref.load %arg0[%c4] : memref<9xf32, #tpu.memory_space<smem>>
    %101 = vector.broadcast %0 : f32 to vector<1x1xf32>
    %102 = arith.mulf %101, %96 : vector<1x1xf32>
    %103 = vector.broadcast %2 : f32 to vector<1x1xf32>
    %104 = arith.mulf %103, %99 : vector<1x1xf32>
    %105 = arith.addf %102, %104 : vector<1x1xf32>
    %106 = vector.broadcast %4 : f32 to vector<1x1xf32>
    %107 = arith.addf %105, %106 : vector<1x1xf32>
    %108 = math.tanh %107 : vector<1x1xf32>
    %109 = vector.broadcast %1 : f32 to vector<1x1xf32>
    %110 = arith.mulf %109, %96 : vector<1x1xf32>
    %111 = vector.broadcast %3 : f32 to vector<1x1xf32>
    %112 = arith.mulf %111, %99 : vector<1x1xf32>
    %113 = arith.addf %110, %112 : vector<1x1xf32>
    %114 = vector.broadcast %5 : f32 to vector<1x1xf32>
    %115 = arith.addf %113, %114 : vector<1x1xf32>
    %116 = math.tanh %115 : vector<1x1xf32>
    %117 = vector.broadcast %100 : f32 to vector<1x1xf32>
    %118 = arith.mulf %117, %108 : vector<1x1xf32>
    %119 = arith.addf %96, %118 : vector<1x1xf32>
    %120 = vector.broadcast %100 : f32 to vector<1x1xf32>
    %121 = arith.mulf %120, %116 : vector<1x1xf32>
    %122 = arith.addf %99, %121 : vector<1x1xf32>
    %c5 = arith.constant 5 : index
    %123 = memref.load %arg0[%c5] : memref<9xf32, #tpu.memory_space<smem>>
    %124 = vector.broadcast %0 : f32 to vector<1x1xf32>
    %125 = arith.mulf %124, %119 : vector<1x1xf32>
    %126 = vector.broadcast %2 : f32 to vector<1x1xf32>
    %127 = arith.mulf %126, %122 : vector<1x1xf32>
    %128 = arith.addf %125, %127 : vector<1x1xf32>
    %129 = vector.broadcast %4 : f32 to vector<1x1xf32>
    %130 = arith.addf %128, %129 : vector<1x1xf32>
    %131 = math.tanh %130 : vector<1x1xf32>
    %132 = vector.broadcast %1 : f32 to vector<1x1xf32>
    %133 = arith.mulf %132, %119 : vector<1x1xf32>
    %134 = vector.broadcast %3 : f32 to vector<1x1xf32>
    %135 = arith.mulf %134, %122 : vector<1x1xf32>
    %136 = arith.addf %133, %135 : vector<1x1xf32>
    %137 = vector.broadcast %5 : f32 to vector<1x1xf32>
    %138 = arith.addf %136, %137 : vector<1x1xf32>
    %139 = math.tanh %138 : vector<1x1xf32>
    %140 = vector.broadcast %123 : f32 to vector<1x1xf32>
    %141 = arith.mulf %140, %131 : vector<1x1xf32>
    %142 = arith.addf %119, %141 : vector<1x1xf32>
    %143 = vector.broadcast %123 : f32 to vector<1x1xf32>
    %144 = arith.mulf %143, %139 : vector<1x1xf32>
    %145 = arith.addf %122, %144 : vector<1x1xf32>
    %c6 = arith.constant 6 : index
    %146 = memref.load %arg0[%c6] : memref<9xf32, #tpu.memory_space<smem>>
    %147 = vector.broadcast %0 : f32 to vector<1x1xf32>
    %148 = arith.mulf %147, %142 : vector<1x1xf32>
    %149 = vector.broadcast %2 : f32 to vector<1x1xf32>
    %150 = arith.mulf %149, %145 : vector<1x1xf32>
    %151 = arith.addf %148, %150 : vector<1x1xf32>
    %152 = vector.broadcast %4 : f32 to vector<1x1xf32>
    %153 = arith.addf %151, %152 : vector<1x1xf32>
    %154 = math.tanh %153 : vector<1x1xf32>
    %155 = vector.broadcast %1 : f32 to vector<1x1xf32>
    %156 = arith.mulf %155, %142 : vector<1x1xf32>
    %157 = vector.broadcast %3 : f32 to vector<1x1xf32>
    %158 = arith.mulf %157, %145 : vector<1x1xf32>
    %159 = arith.addf %156, %158 : vector<1x1xf32>
    %160 = vector.broadcast %5 : f32 to vector<1x1xf32>
    %161 = arith.addf %159, %160 : vector<1x1xf32>
    %162 = math.tanh %161 : vector<1x1xf32>
    %163 = vector.broadcast %146 : f32 to vector<1x1xf32>
    %164 = arith.mulf %163, %154 : vector<1x1xf32>
    %165 = arith.addf %142, %164 : vector<1x1xf32>
    %166 = vector.broadcast %146 : f32 to vector<1x1xf32>
    %167 = arith.mulf %166, %162 : vector<1x1xf32>
    %168 = arith.addf %145, %167 : vector<1x1xf32>
    %c7 = arith.constant 7 : index
    %169 = memref.load %arg0[%c7] : memref<9xf32, #tpu.memory_space<smem>>
    %170 = vector.broadcast %0 : f32 to vector<1x1xf32>
    %171 = arith.mulf %170, %165 : vector<1x1xf32>
    %172 = vector.broadcast %2 : f32 to vector<1x1xf32>
    %173 = arith.mulf %172, %168 : vector<1x1xf32>
    %174 = arith.addf %171, %173 : vector<1x1xf32>
    %175 = vector.broadcast %4 : f32 to vector<1x1xf32>
    %176 = arith.addf %174, %175 : vector<1x1xf32>
    %177 = math.tanh %176 : vector<1x1xf32>
    %178 = vector.broadcast %1 : f32 to vector<1x1xf32>
    %179 = arith.mulf %178, %165 : vector<1x1xf32>
    %180 = vector.broadcast %3 : f32 to vector<1x1xf32>
    %181 = arith.mulf %180, %168 : vector<1x1xf32>
    %182 = arith.addf %179, %181 : vector<1x1xf32>
    %183 = vector.broadcast %5 : f32 to vector<1x1xf32>
    %184 = arith.addf %182, %183 : vector<1x1xf32>
    %185 = math.tanh %184 : vector<1x1xf32>
    %186 = vector.broadcast %169 : f32 to vector<1x1xf32>
    %187 = arith.mulf %186, %177 : vector<1x1xf32>
    %188 = arith.addf %165, %187 : vector<1x1xf32>
    %189 = vector.broadcast %169 : f32 to vector<1x1xf32>
    %190 = arith.mulf %189, %185 : vector<1x1xf32>
    %191 = arith.addf %168, %190 : vector<1x1xf32>
    %c8 = arith.constant 8 : index
    %192 = memref.load %arg0[%c8] : memref<9xf32, #tpu.memory_space<smem>>
    %193 = vector.broadcast %0 : f32 to vector<1x1xf32>
    %194 = arith.mulf %193, %188 : vector<1x1xf32>
    %195 = vector.broadcast %2 : f32 to vector<1x1xf32>
    %196 = arith.mulf %195, %191 : vector<1x1xf32>
    %197 = arith.addf %194, %196 : vector<1x1xf32>
    %198 = vector.broadcast %4 : f32 to vector<1x1xf32>
    %199 = arith.addf %197, %198 : vector<1x1xf32>
    %200 = math.tanh %199 : vector<1x1xf32>
    %201 = vector.broadcast %1 : f32 to vector<1x1xf32>
    %202 = arith.mulf %201, %188 : vector<1x1xf32>
    %203 = vector.broadcast %3 : f32 to vector<1x1xf32>
    %204 = arith.mulf %203, %191 : vector<1x1xf32>
    %205 = arith.addf %202, %204 : vector<1x1xf32>
    %206 = vector.broadcast %5 : f32 to vector<1x1xf32>
    %207 = arith.addf %205, %206 : vector<1x1xf32>
    %208 = math.tanh %207 : vector<1x1xf32>
    %209 = vector.broadcast %192 : f32 to vector<1x1xf32>
    %210 = arith.mulf %209, %200 : vector<1x1xf32>
    %211 = arith.addf %188, %210 : vector<1x1xf32>
    %212 = vector.broadcast %192 : f32 to vector<1x1xf32>
    %213 = arith.mulf %212, %208 : vector<1x1xf32>
    %214 = arith.addf %191, %213 : vector<1x1xf32>
    %215 = tpu.concatenate %6, %27, %50, %73, %96, %119, %142, %165, %188, %211 in 0 : vector<1x1xf32>, vector<1x1xf32>, vector<1x1xf32>, vector<1x1xf32>, vector<1x1xf32>, vector<1x1xf32>, vector<1x1xf32>, vector<1x1xf32>, vector<1x1xf32>, vector<1x1xf32> -> vector<10x1xf32>
    %216 = tpu.concatenate %7, %30, %53, %76, %99, %122, %145, %168, %191, %214 in 0 : vector<1x1xf32>, vector<1x1xf32>, vector<1x1xf32>, vector<1x1xf32>, vector<1x1xf32>, vector<1x1xf32>, vector<1x1xf32>, vector<1x1xf32>, vector<1x1xf32>, vector<1x1xf32> -> vector<10x1xf32>
    %217 = tpu.concatenate %215, %216 in 1 : vector<10x1xf32>, vector<10x1xf32> -> vector<10x2xf32>
    %c0_10 = arith.constant 0 : index
    %c0_11 = arith.constant 0 : index
    %c0_12 = arith.constant 0 : index
    %218 = vector.load %arg4[%c0_10, %c0_11, %c0_12] : memref<1x10x2xf32, #tpu.memory_space<vmem>>, vector<1x10x2xf32>
    %219 = vector.shape_cast %218 : vector<1x10x2xf32> to vector<10x2xf32>
    %220 = vector.shape_cast %217 : vector<10x2xf32> to vector<1x10x2xf32>
    tpu.vector_store %arg4[%c0_10, %c0_11, %c0_12], %220 {strides = array<i32>} : memref<1x10x2xf32, #tpu.memory_space<vmem>>, vector<1x10x2xf32>,
    return
  }
}

</mosaic_0001>

<llo_original>
// kernel: node_forward.1
$region0: #{node_forward.1}
  #allocation0 [shape = 'u32[]', space=smem, size = 0x4, offset = 0x4, fixed_abs, tag = 'smem constant byte address 0x4 - core index']
  #allocation1 [shape = 'u32[72,128]{1,0:T(1,128)}', space=vmem, size = 0x9000, scoped, tag = 'internal scratch']
  %s0 = inlined_call_operand.vmem [shape: f32[9], index: 0, kind: input, shape index: {}]
  %s1 = inlined_call_operand.vmem [shape: f32[4], index: 1, kind: input, shape index: {}]
  %s2 = inlined_call_operand.vmem [shape: f32[2], index: 2, kind: input, shape index: {}]
  %s3 = inlined_call_operand.vmem [shape: f32[1,2], index: 3, kind: input, shape index: {}]
  %s4 = inlined_call_operand.vmem [shape: f32[1,10,2], index: 4, kind: output, shape index: {}]
  %s5 = sld [smem:[#allocation0]]
  $region38: #{node_forward.1} parent=0
    _
  %s7 = ssub.s32 1, %s5
  %s8 = scalar_select 0, %s7, %s5
  $region1: #{node_forward.1} parent=0
    #allocation2 [shape = 'u8[512]{0}', space=smem, size = 0x200, scoped, tag = 'input window, operand 0, single buffered']
    #allocation3 [shape = 's32[1]{0}', space=sflag, size = 0x4, scoped, tag = 'scoped memory for node_forward.1']
    #allocation4 [shape = 'u8[512]{0}', space=smem, size = 0x200, scoped, tag = 'input window, operand 1, single buffered']
    #allocation5 [shape = 's32[1]{0}', space=sflag, size = 0x4, scoped, tag = 'scoped memory for node_forward.1']
    #allocation6 [shape = 'u8[512]{0}', space=smem, size = 0x200, scoped, tag = 'input window, operand 2, single buffered']
    %9 = vsyncpa [#allocation3], 0
    %10 = vsyncpa [#allocation5], 0
    // Predicated region
    $region2: #{node_forward.1} parent=1 // pred_check
      _
    $region3: #{node_forward.1} parent=1 // pred_check_branch
      %12 = sbr.rel (0) target = $region5
    $region4: #{node_forward.1} parent=1 // pred_region
      %14 = vsyncadd [#allocation3], 0
      %s16 = sshll.u32 %s0, 4
      %s17 = int_to_ptr.vmem [resolvable:$true] %s16
      %19 = dma.vmem_to_smem %s17, 16, [#allocation2], [#allocation3]
    $region5: #{node_forward.1} parent=1 // pred_fallthru
      _
    // Predicated region
    $region6: #{node_forward.1} parent=1 // pred_check
      _
    $region7: #{node_forward.1} parent=1 // pred_check_branch
      %21 = sbr.rel (0) target = $region9
    $region8: #{node_forward.1} parent=1 // pred_region
      %23 = vsyncadd [#allocation5], 0
      %s25 = sshll.u32 %s1, 4
      %s26 = int_to_ptr.vmem [resolvable:$true] %s25
      %28 = dma.vmem_to_smem %s26, 16, [#allocation4], [#allocation5]
    $region9: #{node_forward.1} parent=1 // pred_fallthru
      _
    // Predicated region
    $region10: #{node_forward.1} parent=1 // pred_check
      _
    $region11: #{node_forward.1} parent=1 // pred_check_branch
      %30 = sbr.rel (0) target = $region13
    $region12: #{node_forward.1} parent=1 // pred_region
      %32 = vsyncadd [#allocation5], 0
      %s34 = sshll.u32 %s2, 4
      %s35 = int_to_ptr.vmem [resolvable:$true] %s34
      %37 = dma.vmem_to_smem %s35, 16, [#allocation6], [#allocation5]
    $region13: #{node_forward.1} parent=1 // pred_fallthru
      _
    // Predicated region
    $region14: #{node_forward.1} parent=1 // pred_check
      _
    $region15: #{node_forward.1} parent=1 // pred_check_branch
      %39 = sbr.rel (0) target = $region17
    $region16: #{node_forward.1} parent=1 // pred_region
      _
    $region17: #{node_forward.1} parent=1 // pred_fallthru
      _
    // Predicated region
    $region18: #{node_forward.1} parent=1 // pred_check
      _
    $region19: #{node_forward.1} parent=1 // pred_check_branch
      %41 = sbr.rel (0) target = $region21
    $region20: #{node_forward.1} parent=1 // pred_region
      %43 = dma.done [#allocation3], 16
    $region21: #{node_forward.1} parent=1 // pred_fallthru
      _
    // Predicated region
    $region22: #{node_forward.1} parent=1 // pred_check
      _
    $region23: #{node_forward.1} parent=1 // pred_check_branch
      %45 = sbr.rel (0) target = $region25
    $region24: #{node_forward.1} parent=1 // pred_region
      %47 = dma.done [#allocation5], 16
    $region25: #{node_forward.1} parent=1 // pred_fallthru
      _
    // Predicated region
    $region26: #{node_forward.1} parent=1 // pred_check
      _
    $region27: #{node_forward.1} parent=1 // pred_check_branch
      %49 = sbr.rel (0) target = $region29
    $region28: #{node_forward.1} parent=1 // pred_region
      %51 = dma.done [#allocation5], 16
    $region29: #{node_forward.1} parent=1 // pred_fallthru
      _
    %52 = sfence
    %s53 = sld [smem:[#allocation4]]
    %s54 = sld [smem:[#allocation4 + $0x1]]
    %s55 = sld [smem:[#allocation4 + $0x2]]
    %s56 = sld [smem:[#allocation4 + $0x3]]
    %s57 = sld [smem:[#allocation6]]
    %s58 = sld [smem:[#allocation6 + $0x1]]
    %v59 = vld [vmem:[%s3] sm:$0x1]
    %s60 = sld [smem:[#allocation2]]
    %v61 = vstv %s53
    %v62 = vmul.f32 %v61, %v59
    %v63 = vstv %s55
    %v64 = vmul.f32 %v63, %v59
    %66 = vrot.lane.b32.xlu0 %v64, 127
    %v67 = vpop.permute.xlu0 %66
    %v69 = vadd.f32 %v62, %v67
    %v70 = vstv %s57
    %v71 = vadd.f32 %v69, %v70
    %v72 = vtanh.pop %v71
    %v73 = vstv %s54
    %v74 = vmul.f32 %v73, %v59
    %v75 = vstv %s56
    %v76 = vmul.f32 %v75, %v59
    %78 = vrot.lane.b32.xlu0 %v76, 127
    %v79 = vpop.permute.xlu0 %78
    %v81 = vadd.f32 %v74, %v79
    %v82 = vstv %s58
    %v83 = vadd.f32 %v81, %v82
    %v84 = vtanh.pop %v83
    %v85 = vstv %s60
    %v86 = vmul.f32 %v85, %v72
    %v87 = vadd.f32 %v59, %v86
    %v88 = vmul.f32 %v85, %v84
    %90 = vrot.lane.b32.xlu0 %v88, 1
    %v91 = vpop.permute.xlu0 %90
    %v93 = vadd.f32 %v59, %v91
    %s94 = sld [smem:[#allocation2 + $0x1]]
    %v95 = vmul.f32 %v61, %v87
    %v96 = vmul.f32 %v63, %v93
    %98 = vrot.lane.b32.xlu0 %v96, 127
    %v99 = vpop.permute.xlu0 %98
    %v101 = vadd.f32 %v95, %v99
    %v102 = vadd.f32 %v101, %v70
    %v103 = vtanh.pop %v102
    %v104 = vmul.f32 %v73, %v87
    %v105 = vmul.f32 %v75, %v93
    %107 = vrot.lane.b32.xlu0 %v105, 127
    %v108 = vpop.permute.xlu0 %107
    %v110 = vadd.f32 %v104, %v108
    %v111 = vadd.f32 %v110, %v82
    %v112 = vtanh.pop %v111
    %v113 = vstv %s94
    %v114 = vmul.f32 %v113, %v103
    %v115 = vadd.f32 %v87, %v114
    %v116 = vmul.f32 %v113, %v112
    %118 = vrot.lane.b32.xlu0 %v116, 1
    %v119 = vpop.permute.xlu0 %118
    %v121 = vadd.f32 %v93, %v119
    %s122 = sld [smem:[#allocation2 + $0x2]]
    %v123 = vmul.f32 %v61, %v115
    %v124 = vmul.f32 %v63, %v121
    %126 = vrot.lane.b32.xlu0 %v124, 127
    %v127 = vpop.permute.xlu0 %126
    %v129 = vadd.f32 %v123, %v127
    %v130 = vadd.f32 %v129, %v70
    %v131 = vtanh.pop %v130
    %v132 = vmul.f32 %v73, %v115
    %v133 = vmul.f32 %v75, %v121
    %135 = vrot.lane.b32.xlu0 %v133, 127
    %v136 = vpop.permute.xlu0 %135
    %v138 = vadd.f32 %v132, %v136
    %v139 = vadd.f32 %v138, %v82
    %v140 = vtanh.pop %v139
    %v141 = vstv %s122
    %v142 = vmul.f32 %v141, %v131
    %v143 = vadd.f32 %v115, %v142
    %v144 = vmul.f32 %v141, %v140
    %146 = vrot.lane.b32.xlu0 %v144, 1
    %v147 = vpop.permute.xlu0 %146
    %v149 = vadd.f32 %v121, %v147
    %s150 = sld [smem:[#allocation2 + $0x3]]
    %v151 = vmul.f32 %v61, %v143
    %v152 = vmul.f32 %v63, %v149
    %154 = vrot.lane.b32.xlu0 %v152, 127
    %v155 = vpop.permute.xlu0 %154
    %v157 = vadd.f32 %v151, %v155
    %v158 = vadd.f32 %v157, %v70
    %v159 = vtanh.pop %v158
    %v160 = vmul.f32 %v73, %v143
    %v161 = vmul.f32 %v75, %v149
    %163 = vrot.lane.b32.xlu0 %v161, 127
    %v164 = vpop.permute.xlu0 %163
    %v166 = vadd.f32 %v160, %v164
    %v167 = vadd.f32 %v166, %v82
    %v168 = vtanh.pop %v167
    %v169 = vstv %s150
    %v170 = vmul.f32 %v169, %v159
    %v171 = vadd.f32 %v143, %v170
    %v172 = vmul.f32 %v169, %v168
    %174 = vrot.lane.b32.xlu0 %v172, 1
    %v175 = vpop.permute.xlu0 %174
    %v177 = vadd.f32 %v149, %v175
    %s178 = sld [smem:[#allocation2 + $0x4]]
    %v179 = vmul.f32 %v61, %v171
    %v180 = vmul.f32 %v63, %v177
    %182 = vrot.lane.b32.xlu0 %v180, 127
    %v183 = vpop.permute.xlu0 %182
    %v185 = vadd.f32 %v179, %v183
    %v186 = vadd.f32 %v185, %v70
    %v187 = vtanh.pop %v186
    %v188 = vmul.f32 %v73, %v171
    %v189 = vmul.f32 %v75, %v177
    %191 = vrot.lane.b32.xlu0 %v189, 127
    %v192 = vpop.permute.xlu0 %191
    %v194 = vadd.f32 %v188, %v192
    %v195 = vadd.f32 %v194, %v82
    %v196 = vtanh.pop %v195
    %v197 = vstv %s178
    %v198 = vmul.f32 %v197, %v187
    %v199 = vadd.f32 %v171, %v198
    %v200 = vmul.f32 %v197, %v196
    %202 = vrot.lane.b32.xlu0 %v200, 1
    %v203 = vpop.permute.xlu0 %202
    %v205 = vadd.f32 %v177, %v203
    %s206 = sld [smem:[#allocation2 + $0x5]]
    %v207 = vmul.f32 %v61, %v199
    %v208 = vmul.f32 %v63, %v205
    %210 = vrot.lane.b32.xlu0 %v208, 127
    %v211 = vpop.permute.xlu0 %210
    %v213 = vadd.f32 %v207, %v211
    %v214 = vadd.f32 %v213, %v70
    %v215 = vtanh.pop %v214
    %v216 = vmul.f32 %v73, %v199
    %v217 = vmul.f32 %v75, %v205
    %219 = vrot.lane.b32.xlu0 %v217, 127
    %v220 = vpop.permute.xlu0 %219
    %v222 = vadd.f32 %v216, %v220
    %v223 = vadd.f32 %v222, %v82
    %v224 = vtanh.pop %v223
    %v225 = vstv %s206
    %v226 = vmul.f32 %v225, %v215
    %v227 = vadd.f32 %v199, %v226
    %v228 = vmul.f32 %v225, %v224
    %230 = vrot.lane.b32.xlu0 %v228, 1
    %v231 = vpop.permute.xlu0 %230
    %v233 = vadd.f32 %v205, %v231
    %s234 = sld [smem:[#allocation2 + $0x6]]
    %v235 = vmul.f32 %v61, %v227
    %v236 = vmul.f32 %v63, %v233
    %238 = vrot.lane.b32.xlu0 %v236, 127
    %v239 = vpop.permute.xlu0 %238
    %v241 = vadd.f32 %v235, %v239
    %v242 = vadd.f32 %v241, %v70
    %v243 = vtanh.pop %v242
    %v244 = vmul.f32 %v73, %v227
    %v245 = vmul.f32 %v75, %v233
    %247 = vrot.lane.b32.xlu0 %v245, 127
    %v248 = vpop.permute.xlu0 %247
    %v250 = vadd.f32 %v244, %v248
    %v251 = vadd.f32 %v250, %v82
    %v252 = vtanh.pop %v251
    %v253 = vstv %s234
    %v254 = vmul.f32 %v253, %v243
    %v255 = vadd.f32 %v227, %v254
    %v256 = vmul.f32 %v253, %v252
    %258 = vrot.lane.b32.xlu0 %v256, 1
    %v259 = vpop.permute.xlu0 %258
    %v261 = vadd.f32 %v233, %v259
    %s262 = sld [smem:[#allocation2 + $0x7]]
    %v263 = vmul.f32 %v61, %v255
    %v264 = vmul.f32 %v63, %v261
    %266 = vrot.lane.b32.xlu0 %v264, 127
    %v267 = vpop.permute.xlu0 %266
    %v269 = vadd.f32 %v263, %v267
    %v270 = vadd.f32 %v269, %v70
    %v271 = vtanh.pop %v270
    %v272 = vmul.f32 %v73, %v255
    %v273 = vmul.f32 %v75, %v261
    %275 = vrot.lane.b32.xlu0 %v273, 127
    %v276 = vpop.permute.xlu0 %275
    %v278 = vadd.f32 %v272, %v276
    %v279 = vadd.f32 %v278, %v82
    %v280 = vtanh.pop %v279
    %v281 = vstv %s262
    %v282 = vmul.f32 %v281, %v271
    %v283 = vadd.f32 %v255, %v282
    %v284 = vmul.f32 %v281, %v280
    %286 = vrot.lane.b32.xlu0 %v284, 1
    %v287 = vpop.permute.xlu0 %286
    %v289 = vadd.f32 %v261, %v287
    %s290 = sld [smem:[#allocation2 + $0x8]]
    %v291 = vmul.f32 %v61, %v283
    %v292 = vmul.f32 %v63, %v289
    %294 = vrot.lane.b32.xlu0 %v292, 127
    %v295 = vpop.permute.xlu0 %294
    %v297 = vadd.f32 %v291, %v295
    %v298 = vadd.f32 %v297, %v70
    %v299 = vtanh.pop %v298
    %v300 = vmul.f32 %v73, %v283
    %v301 = vmul.f32 %v75, %v289
    %303 = vrot.lane.b32.xlu0 %v301, 127
    %v304 = vpop.permute.xlu0 %303
    %v306 = vadd.f32 %v300, %v304
    %v307 = vadd.f32 %v306, %v82
    %v308 = vtanh.pop %v307
    %v309 = vstv %s290
    %v310 = vmul.f32 %v309, %v299
    %v311 = vadd.f32 %v283, %v310
    %v312 = vmul.f32 %v309, %v308
    %314 = vrot.lane.b32.xlu0 %v312, 1
    %v315 = vpop.permute.xlu0 %314
    %v317 = vadd.f32 %v289, %v315
    %v319 = vperm.slane %v87, 0
    %v322 = vperm.slane %v115, 0
    %v325 = vperm.slane %v143, 0
    %v328 = vperm.slane %v171, 0
    %v331 = vperm.slane %v199, 0
    %v334 = vperm.slane %v227, 0
    %v337 = vperm.slane %v255, 0
    %v340 = vperm.slane %v311, 0
    %vm342 = vcmask 1040384
    %v343 = vsel %vm342, %v59, %v319
    %vm344 = vcmask 1041408
    %v345 = vsel %vm344, %v343, %v322
    %vm346 = vcmask 1042432
    %v347 = vsel %vm346, %v345, %v325
    %vm348 = vcmask 1043456
    %v349 = vsel %vm348, %v347, %v328
    %vm350 = vcmask 1044480
    %v351 = vsel %vm350, %v349, %v331
    %vm352 = vcmask 1045504
    %v353 = vsel %vm352, %v351, %v334
    %vm354 = vcmask 1046528
    %v355 = vsel %vm354, %v353, %v337
    %v356 = vsel %vm342, %v283, %v340
    %v358 = vperm.slane %v93, 0
    %v361 = vperm.slane %v121, 0
    %v364 = vperm.slane %v149, 0
    %v367 = vperm.slane %v177, 0
    %v370 = vperm.slane %v205, 0
    %v373 = vperm.slane %v233, 0
    %v376 = vperm.slane %v261, 0
    %v379 = vperm.slane %v317, 0
    %v381 = vsel %vm342, %v59, %v358
    %v382 = vsel %vm344, %v381, %v361
    %v383 = vsel %vm346, %v382, %v364
    %v384 = vsel %vm348, %v383, %v367
    %v385 = vsel %vm350, %v384, %v370
    %v386 = vsel %vm352, %v385, %v373
    %v387 = vsel %vm354, %v386, %v376
    %v388 = vsel %vm342, %v289, %v379
    %vm389 = vcmask 7168
    %v390 = vsel %vm389, %v355, %v387
    %v391 = vsel %vm389, %v356, %v388
    %vm392 = vcmask 15360
    %393 = vst.msk [vmem:[%s4] sm:$0xff] %vm392, %v390
    %vm394 = vcmask 9216
    %395 = vst.msk [vmem:[%s4 + $0x8] sm:$0x3] %vm394, %v391
    // Predicated region
    $region30: #{node_forward.1} parent=1 // pred_check
      _
    $region31: #{node_forward.1} parent=1 // pred_check_branch
      %397 = sbr.rel (0) target = $region33
    $region32: #{node_forward.1} parent=1 // pred_region
      _
    $region33: #{node_forward.1} parent=1 // pred_fallthru
      _
    // Predicated region
    $region34: #{node_forward.1} parent=1 // pred_check
      _
    $region35: #{node_forward.1} parent=1 // pred_check_branch
      %399 = sbr.rel (0) target = $region37
    $region36: #{node_forward.1} parent=1 // pred_region
      _
    $region37: #{node_forward.1} parent=1 // pred_fallthru
      _
    %400 = vsyncpa [#allocation3], 1
    %401 = vsyncpa [#allocation5], 1

</llo_original>
